<compile_context>
chip_gen: v5e
topology: v5e:2x2
jax: 0.10.0
libtpu: 0.0.40
codegen_flags: <defaults>
</compile_context>

<pallas_src>
import functools
import math

import jax
import jax.numpy as jnp
from jax.experimental import pallas as pl
from jax.experimental.pallas import tpu as pltpu


# ----------------------------------------------------------------------------
# Buffer construction (mirrors PositionalEncoding2.__init__)
# ----------------------------------------------------------------------------
def make_positional_encoding(d_model: int, max_len: int = 1500, resample: int = 1):
    position = jnp.arange(max_len, dtype=jnp.float32)[:, None]            # [L, 1]
    div_term = jnp.exp(
        jnp.arange(0, d_model, 2, dtype=jnp.float32) * (-math.log(10000.0) / d_model)
    )                                                                     # [D/2]
    pe = jnp.zeros((max_len, 1, d_model), dtype=jnp.float32)
    pe = pe.at[:, 0, 0::2].set(jnp.sin(position * div_term))
    pe = pe.at[:, 0, 1::2].set(jnp.cos(position * div_term))
    if resample > 1:
        # nn.Upsample(mode='nearest') along seq == repeat each position
        pe = jnp.repeat(pe, resample, axis=0)
    return pe


# ----------------------------------------------------------------------------
# Kernels (pure jnp inside -> safe on TPU and in interpret mode)
# ----------------------------------------------------------------------------
def _pe_add_kernel(x_ref, pe_ref, out_ref):
    # x_ref / out_ref: (ts, D) slab of one batch element; pe_ref: (ts, D)
    y = x_ref[...].astype(jnp.float32) + pe_ref[...].astype(jnp.float32)
    out_ref[...] = y.astype(out_ref.dtype)


def _pe_add_dropout_kernel(x_ref, pe_ref, bits_ref, out_ref, *, threshold, scale):
    y = x_ref[...].astype(jnp.float32) + pe_ref[...].astype(jnp.float32)
    keep = bits_ref[...] >= jnp.uint32(threshold)        # P(drop) == p
    out_ref[...] = jnp.where(keep, y * jnp.float32(scale), 0.0).astype(out_ref.dtype)


# ----------------------------------------------------------------------------
# Tile sizing: biggest seq tile whose double-buffered working set fits budget
# ----------------------------------------------------------------------------
def _choose_seq_tile(S, D, itemsize, n_streams, budget_bytes):
    ts = budget_bytes // (2 * n_streams * max(D, 1) * itemsize)   # 2 = double buffer
    ts = max(8, (ts // 8) * 8)                                    # sublane multiple
    ts = min(ts, ((S + 7) // 8) * 8)                              # one tile is enough
    return ts


# ----------------------------------------------------------------------------
# Forward: y = dropout(x + pe[:S]) ; x is [seq_len, batch, d_model]
# ----------------------------------------------------------------------------
def positional_encoding2_forward(x, pe, *, p=0.1, apply_dropout=True, rng_key=None,
                                 vmem_tile_budget=32 * 1024 * 1024):
    S, B, D = x.shape
    max_len = pe.shape[0]
    assert max_len >= S and pe.shape[-1] == D
    assert 0.0 <= p < 1.0, "dropout prob must be in [0, 1)"

    dtype = x.dtype
    pe2d = pe.reshape(max_len, D).astype(dtype)      # free reshape; cast is a no-op for f32
    xt = jnp.transpose(x, (1, 0, 2))                 # [B, S, D]: seq->sublanes, D->lanes

    use_dropout = bool(apply_dropout) and p > 0.0
    n_streams = 4 if use_dropout else 3              # x, pe, out (+ bits)
    ts = _choose_seq_tile(S, D, jnp.dtype(dtype).itemsize, n_streams, vmem_tile_budget)
    grid = (pl.cdiv(S, ts), B)                       # batch innermost -> pe tile reused

    bsd_spec = pl.BlockSpec((None, ts, D), lambda i, b: (b, i, 0))   # batch squeezed
    pe_spec = pl.BlockSpec((ts, D), lambda i, b: (i, 0))

    compiler_params = pltpu.CompilerParams(
        dimension_semantics=("parallel", "parallel"),   # disjoint output tiles
        vmem_limit_bytes=48 * 1024 * 1024,              # headroom on v7x's 64 MiB VMEM
    )

    if use_dropout:
        if rng_key is None:
            rng_key = jax.random.PRNGKey(0)
        bits = jax.random.bits(rng_key, (B, S, D), dtype=jnp.uint32)
        threshold = min(int(p * 4294967296.0), 4294967295)
        kernel = functools.partial(_pe_add_dropout_kernel,
                                   threshold=threshold, scale=1.0 / (1.0 - p))
        in_specs = [bsd_spec, pe_spec, bsd_spec]
        args = (xt, pe2d, bits)
    else:
        kernel = _pe_add_kernel
        in_specs = [bsd_spec, pe_spec]
        args = (xt, pe2d)

    out_t = pl.pallas_call(
        kernel,
        out_shape=jax.ShapeDtypeStruct((B, S, D), dtype),
        grid=grid,
        in_specs=in_specs,
        out_specs=bsd_spec,
        compiler_params=compiler_params,
    )(*args)

    return jnp.transpose(out_t, (1, 0, 2))           # back to [seq, batch, d_model]


# ----------------------------------------------------------------------------
# Demo / self-check
# ----------------------------------------------------------------------------
if __name__ == "__main__":
    key = jax.random.PRNGKey(0)
    kx, kd = jax.random.split(key)

    seq_len, batch, d_model = 8, 2, 32
    max_len = 64
    dropout_p = 0.1

    x = jax.random.normal(kx, (seq_len, batch, d_model), dtype=jnp.float32)
    pe = make_positional_encoding(d_model, max_len=max_len, resample=1)
    y_ref = x + pe[:seq_len]

    # 1) Eval mode (dropout off): kernel must equal x + pe[:S].
    y_eval = jax.block_until_ready(
        positional_encoding2_forward(x, pe, p=dropout_p, apply_dropout=False))
    assert y_eval.shape == (seq_len, batch, d_model)
    assert jnp.allclose(y_eval, y_ref, atol=1e-6), "eval-mode mismatch"

    # 2) Training mode: same random bits recomputed on host give an exact reference.
    y_train = jax.block_until_ready(
        positional_encoding2_forward(x, pe, p=dropout_p, apply_dropout=True, rng_key=kd))
    assert y_train.shape == (seq_len, batch, d_model)
    bits = jax.random.bits(kd, (batch, seq_len, d_model), dtype=jnp.uint32)
    keep = jnp.transpose(bits, (1, 0, 2)) >= jnp.uint32(int(dropout_p * 4294967296.0))
    y_train_ref = jnp.where(keep, y_ref / (1.0 - dropout_p), 0.0)
    assert jnp.allclose(y_train, y_train_ref, atol=1e-5), "training-mode mismatch"

    print("KERNEL_OK")
</pallas_src>

<mosaic_0001>
module attributes {stable_mosaic.version = 11 : i64} {
  func.func @_pe_add_kernel(%arg0: i32, %arg1: i32, %arg2: memref<1x8x32xf32, #tpu.memory_space<vmem>>, %arg3: memref<8x32xf32, #tpu.memory_space<vmem>>, %arg4: memref<1x8x32xf32, #tpu.memory_space<vmem>>) attributes {dimension_semantics = [#tpu.dimension_semantics<parallel>, #tpu.dimension_semantics<parallel>], iteration_bounds = array<i64: 1, 2>, scalar_prefetch = 0 : i64, scratch_operands = 0 : i64, tpu.core_type = #tpu.core_type<tc>, window_params = [{transform_indices = @transform_0, window_bounds = array<i64: 1, 8, 32>}, {transform_indices = @transform_1, window_bounds = array<i64: 8, 32>}, {transform_indices = @transform_2, window_bounds = array<i64: 1, 8, 32>}]} {
    %c0 = arith.constant 0 : index
    %c0_0 = arith.constant 0 : index
    %c0_1 = arith.constant 0 : index
    %0 = vector.load %arg2[%c0, %c0_0, %c0_1] : memref<1x8x32xf32, #tpu.memory_space<vmem>>, vector<1x8x32xf32>
    %1 = vector.shape_cast %0 : vector<1x8x32xf32> to vector<8x32xf32>
    %c0_2 = arith.constant 0 : index
    %c0_3 = arith.constant 0 : index
    %2 = vector.load %arg3[%c0_2, %c0_3] : memref<8x32xf32, #tpu.memory_space<vmem>>, vector<8x32xf32>
    %3 = arith.addf %1, %2 : vector<8x32xf32>
    %c0_4 = arith.constant 0 : index
    %c0_5 = arith.constant 0 : index
    %c0_6 = arith.constant 0 : index
    %4 = vector.load %arg4[%c0_4, %c0_5, %c0_6] : memref<1x8x32xf32, #tpu.memory_space<vmem>>, vector<1x8x32xf32>
    %5 = vector.shape_cast %4 : vector<1x8x32xf32> to vector<8x32xf32>
    %6 = vector.shape_cast %3 : vector<8x32xf32> to vector<1x8x32xf32>
    tpu.vector_store %arg4[%c0_4, %c0_5, %c0_6], %6 {strides = array<i32>} : memref<1x8x32xf32, #tpu.memory_space<vmem>>, vector<1x8x32xf32>,
    return
  }
  func.func @transform_0(%arg0: i32, %arg1: i32) -> (i32, i32, i32) {
    %c0_i32 = arith.constant 0 : i32
    %c0_i32_0 = arith.constant 0 : i32
    return %arg1, %arg0, %c0_i32 : i32, i32, i32
  }
  func.func @transform_1(%arg0: i32, %arg1: i32) -> (i32, i32) {
    %c0_i32 = arith.constant 0 : i32
    %c0_i32_0 = arith.constant 0 : i32
    return %arg0, %c0_i32 : i32, i32
  }
  func.func @transform_2(%arg0: i32, %arg1: i32) -> (i32, i32, i32) {
    %c0_i32 = arith.constant 0 : i32
    %c0_i32_0 = arith.constant 0 : i32
    return %arg1, %arg0, %c0_i32 : i32, i32, i32
  }
}

</mosaic_0001>

<llo_original>
// kernel: tpu_custom_call.1
$region0: #{tpu_custom_call.1}
  #allocation0 [shape = 'u32[]', space=smem, size = 0x4, offset = 0x4, fixed_abs, tag = 'smem constant byte address 0x4 - core index']
  #allocation1 [shape = 'u32[72,128]{1,0:T(1,128)}', space=vmem, size = 0x9000, scoped, tag = 'internal scratch']
  %s0 = inlined_call_operand.vmem [shape: f32[2,8,32], index: 0, kind: input, shape index: {}]
  %s1 = inlined_call_operand.vmem [shape: f32[64,32], index: 1, kind: input, shape index: {}]
  %s2 = inlined_call_operand.hbm [shape: f32[2,8,32], index: 2, kind: output, shape index: {}]
  %s3 = sld [smem:[#allocation0]]
  $region41: #{tpu_custom_call.1} parent=0
    _
  %s5 = ssub.s32 1, %s3
  %s6 = scalar_select 0, %s5, %s3
  $region1: #{tpu_custom_call.1} parent=0
    #allocation2 [shape = 'u8[8192]{0}', space=vmem, size = 0x2000, scoped, tag = 'output window, operand 0']
    #allocation3 [shape = 's32[2]{0}', space=sflag, size = 0x8, scoped, tag = 'scoped memory for tpu_custom_call.1']
    %7 = vsyncpa [#allocation3], 0
    %s8 = scalar_lea.sflag [#allocation3], 1
    %9 = vsyncpa %s8, 0
    loop: start=0, step=1, limit=4
    $region2: #{tpu_custom_call.1} parent=1 // loop_pre_header
      _
    $region3: #{tpu_custom_call.1} parent=1 // loop_header
      %s11 = sphi 0, %s15
      %p12 = scmp.ge.s32.totalorder %s11, 4
      %s18 = sphi 0, %s30
      %s19 = sphi 0, %s26
      %s20 = sphi 0, %s18
      %s21 = sphi 0, %s19
      %s22 = sphi 0, %s20
      %s23 = sphi 0, %s21
      %s35 = sphi 0, %s37
      %s38 = sphi 0, %s35
      %s39 = sphi 0, %s38
      %s55 = sphi 0, %s39
      %s61 = sphi 0, %s63
      %s64 = sphi 0, %s61
      %s65 = sphi 0, %s64
      %s81 = sphi 0, %s65
      %s89 = sphi 0, %s91
      %s92 = sphi 0, %s89
      %s93 = sphi 0, %s92
      %s109 = sphi 0, %s93
    $region4: #{tpu_custom_call.1} parent=1 // loop_header_branch
      %14 = sbr.rel (%p12) target = $region8
    $region5: #{tpu_custom_call.1} parent=1 // loop_body
      %s16 = ssub.s32 %s11, 1
      %s17 = ssub.s32 %s11, 2
      %s24 = sadd.s32 1, %s19
      %p25 = scmp.ge.s32.totalorder %s24, 2
      %s26 = scalar_select %p25, 0, %s24
      %s27 = sadd.s32 1, %s18
      %s28 = scalar_select %p25, %s27, %s18
      %p29 = scmp.ge.s32.totalorder %s28, 1
      %s30 = scalar_select %p29, 0, %s28
      %s31 = ssub.s32 %s19, %s26
      %s32 = ssub.s32 %s18, %s30
      %s33 = sor.u32 %s31, %s32
      %p34 = scmp.eq.s32.totalorder %s33, 0
      %s36 = sadd.s32 %s35, 1
      %s37 = scalar_select %p34, %s35, %s36
      %p40 = pneg %p34
      %p41 = scmp.eq.s32.totalorder %s11, 1
      %p42 = por %p40, %p41
      %p43 = scmp.ne.s32.totalorder %s35, %s38
      %p44 = scmp.eq.s32.totalorder %s11, 0
      %p45 = por %p43, %p44
      %p46 = scmp.ne.s32.totalorder %s35, %s38
      %p47 = scmp.eq.s32.totalorder %s16, 1
      %p48 = por %p46, %p47
      %p49 = scmp.ne.s32.totalorder %s38, %s39
      %p50 = scmp.eq.s32.totalorder %s16, 0
      %p51 = por %p49, %p50
      %p52 = scmp.ne.s32.totalorder %s38, %s39
      %p53 = scmp.eq.s32.totalorder %s17, 1
      %p54 = por %p52, %p53
      %p56 = scmp.ne.s32.totalorder %s39, %s55
      %p57 = scmp.eq.s32.totalorder %s17, 0
      %p58 = por %p56, %p57
      %s59 = ssub.s32 %s18, %s30
      %p60 = scmp.eq.s32.totalorder %s59, 0
      %s62 = sadd.s32 %s61, 1
      %s63 = scalar_select %p60, %s61, %s62
      %p66 = pneg %p60
      %p67 = scmp.eq.s32.totalorder %s11, 1
      %p68 = por %p66, %p67
      %p69 = scmp.ne.s32.totalorder %s61, %s64
      %p70 = scmp.eq.s32.totalorder %s11, 0
      %p71 = por %p69, %p70
      %p72 = scmp.ne.s32.totalorder %s61, %s64
      %p73 = scmp.eq.s32.totalorder %s16, 1
      %p74 = por %p72, %p73
      %p75 = scmp.ne.s32.totalorder %s64, %s65
      %p76 = scmp.eq.s32.totalorder %s16, 0
      %p77 = por %p75, %p76
      %p78 = scmp.ne.s32.totalorder %s64, %s65
      %p79 = scmp.eq.s32.totalorder %s17, 1
      %p80 = por %p78, %p79
      %p82 = scmp.ne.s32.totalorder %s65, %s81
      %p83 = scmp.eq.s32.totalorder %s17, 0
      %p84 = por %p82, %p83
      %s85 = ssub.s32 %s19, %s26
      %s86 = ssub.s32 %s18, %s30
      %s87 = sor.u32 %s85, %s86
      %p88 = scmp.eq.s32.totalorder %s87, 0
      %s90 = sadd.s32 %s89, 1
      %s91 = scalar_select %p88, %s89, %s90
      %p94 = pneg %p88
      %p95 = scmp.eq.s32.totalorder %s11, 1
      %p96 = por %p94, %p95
      %p97 = scmp.ne.s32.totalorder %s89, %s92
      %p98 = scmp.eq.s32.totalorder %s11, 0
      %p99 = por %p97, %p98
      %p100 = scmp.ne.s32.totalorder %s89, %s92
      %p101 = scmp.eq.s32.totalorder %s16, 1
      %p102 = por %p100, %p101
      %p103 = scmp.ne.s32.totalorder %s92, %s93
      %p104 = scmp.eq.s32.totalorder %s16, 0
      %p105 = por %p103, %p104
      %p106 = scmp.ne.s32.totalorder %s92, %s93
      %p107 = scmp.eq.s32.totalorder %s17, 1
      %p108 = por %p106, %p107
      %p110 = scmp.ne.s32.totalorder %s93, %s109
      %p111 = scmp.eq.s32.totalorder %s17, 0
      %p112 = por %p110, %p111
      %p113 = scmp.le.s32.totalorder 1, %s11
      %p114 = scmp.lt.s32.totalorder %s11, 3
      %p115 = pnand %p113, %p114
      %p116 = pneg %p115
      // Predicated region
      $region9: #{tpu_custom_call.1} parent=5 // pred_check
        _
      $region10: #{tpu_custom_call.1} parent=5 // pred_check_branch
        %118 = sbr.rel (%p115) target = $region12
      $region11: #{tpu_custom_call.1} parent=5 // pred_region
        %s119 = ssub.s32 %s11, 1
        // Predicated region
        $region13: #{tpu_custom_call.1} parent=11 // pred_check
          %p120 = pneg %p77
        $region14: #{tpu_custom_call.1} parent=11 // pred_check_branch
          %122 = sbr.rel (%p120) target = $region16
        $region15: #{tpu_custom_call.1} parent=11 // pred_region
          %p123 = scmp.lt.s32.totalorder %s20, 7
          %s124 = scalar_select %p123, %s20, 7
          %s125 = smul.addr %s124, 8
          %s126 = scalar_lea.vmem %s1, %s125
        $region16: #{tpu_custom_call.1} parent=11 // pred_fallthru
          _
      $region12: #{tpu_custom_call.1} parent=5 // pred_fallthru
        _
      %p127 = scmp.lt.s32.totalorder %s11, 2
      // Predicated region
      $region17: #{tpu_custom_call.1} parent=5 // pred_check
        %p128 = pneg %p127
      $region18: #{tpu_custom_call.1} parent=5 // pred_check_branch
        %130 = sbr.rel (%p128) target = $region20
      $region19: #{tpu_custom_call.1} parent=5 // pred_region
        // Predicated region
        $region21: #{tpu_custom_call.1} parent=19 // pred_check
          %p131 = pneg %p45
        $region22: #{tpu_custom_call.1} parent=19 // pred_check_branch
          %133 = sbr.rel (%p131) target = $region24
        $region23: #{tpu_custom_call.1} parent=19 // pred_region
          %p134 = scmp.lt.s32.totalorder %s19, 1
          %s135 = scalar_select %p134, %s19, 1
          %p136 = scmp.lt.s32.totalorder %s18, 0
          %s137 = scalar_select %p136, %s18, 0
          %s138 = sadd.s32 %s137, %s135
          %s139 = smul.addr %s138, 8
          %s140 = scalar_lea.vmem %s0, %s139
        $region24: #{tpu_custom_call.1} parent=19 // pred_fallthru
          _
      $region20: #{tpu_custom_call.1} parent=5 // pred_fallthru
        _
      %p141 = scmp.le.s32.totalorder 1, %s11
      %p142 = scmp.lt.s32.totalorder %s11, 3
      %p143 = pnand %p141, %p142
      %p144 = pneg %p143
      // Predicated region
      $region25: #{tpu_custom_call.1} parent=5 // pred_check
        _
      $region26: #{tpu_custom_call.1} parent=5 // pred_check_branch
        %146 = sbr.rel (%p143) target = $region28
      $region27: #{tpu_custom_call.1} parent=5 // pred_region
        %s147 = ssub.s32 %s11, 1
        %p148 = scmp.lt.s32.totalorder %s21, 1
        %s149 = scalar_select %p148, %s21, 1
        %p150 = scmp.lt.s32.totalorder %s20, 0
        %s151 = scalar_select %p150, %s20, 0
        %s152 = sadd.s32 %s151, %s149
        %s153 = smul.addr %s152, 8
        %s154 = scalar_lea.vmem %s0, %s153
        %p155 = pneg %p51
        %p156 = pneg %p48
        %p157 = scmp.lt.s32.totalorder %s20, 7
        %s158 = scalar_select %p157, %s20, 7
        %s159 = smul.addr %s158, 8
        %s160 = scalar_lea.vmem %s1, %s159
        %p161 = pneg %p77
        %p162 = pneg %p74
        %p163 = pneg %p105
        %p164 = pneg %p102
        %s165 = sand.u32 %s92, 1
        %s166 = scalar_lea.sflag [#allocation3], %s165
        %s167 = sand.u32 %s92, 1
        %s168 = smul.addr %s167, 8
        %s169 = scalar_lea.vmem [#allocation2], %s168
        %p170 = scmp.lt.s32.totalorder %s21, 1
        %s171 = scalar_select %p170, %s21, 1
        %p172 = scmp.lt.s32.totalorder %s20, 0
        %s173 = scalar_select %p172, %s20, 0
        %s174 = sadd.s32 %s173, %s171
        %s175 = smul.addr %s174, 8
        %s176 = scalar_lea.vmem %s0, %s175
        %p177 = scmp.lt.s32.totalorder %s20, 7
        %s178 = scalar_select %p177, %s20, 7
        %s179 = smul.addr %s178, 8
        %s180 = scalar_lea.vmem %s1, %s179
        %v181 = vld [vmem:[%s176] sm:$0xff]
        %v182 = vld [vmem:[%s180] sm:$0xff]
        %v183 = vadd.f32 %v181, %v182
        %vm184 = vcmask 261120
        %185 = vst.msk [vmem:[%s169] sm:$0xff] %vm184, %v183
        %s186 = sand.u32 %s92, 1
        %s187 = scalar_lea.sflag [#allocation3], %s186
        %s188 = sand.u32 %s92, 1
        %s189 = smul.addr %s188, 8
        %s190 = scalar_lea.vmem [#allocation2], %s189
        // Predicated region
        $region29: #{tpu_custom_call.1} parent=27 // pred_check
          %p191 = pneg %p102
        $region30: #{tpu_custom_call.1} parent=27 // pred_check_branch
          %193 = sbr.rel (%p191) target = $region32
        $region31: #{tpu_custom_call.1} parent=27 // pred_region
          %195 = vsyncadd %s187, 0
          %s196 = sadd.s32 %s20, %s21
          %s197 = smul.addr %s196, 8
          %s198 = scalar_lea.hbm %s2, %s197
          %s200 = sshll.u32 %s190, 4
          %s201 = int_to_ptr.vmem [resolvable:$true] %s200
          %s202 = sshll.u32 %s198, 4
          %s203 = int_to_ptr.hbm [resolvable:$true] %s202
          %205 = dma.vmem_to_hbm [thread:$0]  %s201, 128, %s203, %s187
        $region32: #{tpu_custom_call.1} parent=27 // pred_fallthru
          _
      $region28: #{tpu_custom_call.1} parent=5 // pred_fallthru
        _
      %p206 = scmp.le.s32.totalorder 2, %s11
      // Predicated region
      $region33: #{tpu_custom_call.1} parent=5 // pred_check
        %p207 = pneg %p206
      $region34: #{tpu_custom_call.1} parent=5 // pred_check_branch
        %209 = sbr.rel (%p207) target = $region36
      $region35: #{tpu_custom_call.1} parent=5 // pred_region
        %s210 = ssub.s32 %s11, 2
        // Predicated region
        $region37: #{tpu_custom_call.1} parent=35 // pred_check
          %p211 = pneg %p108
        $region38: #{tpu_custom_call.1} parent=35 // pred_check_branch
          %213 = sbr.rel (%p211) target = $region40
        $region39: #{tpu_custom_call.1} parent=35 // pred_region
          %s214 = sand.u32 %s93, 1
          %s215 = scalar_lea.sflag [#allocation3], %s214
          %s216 = sand.u32 %s93, 1
          %s217 = smul.addr %s216, 8
          %s218 = scalar_lea.vmem [#allocation2], %s217
          %220 = dma.done %s215, 128
        $region40: #{tpu_custom_call.1} parent=35 // pred_fallthru
          _
      $region36: #{tpu_custom_call.1} parent=5 // pred_fallthru
        _
    $region6: #{tpu_custom_call.1} parent=1 // loop_footer
      %s15 = sadd.s32 1, %s11
    $region7: #{tpu_custom_call.1} parent=1 // loop_footer_branch
      %10 = sbr.rel target = $region3
    $region8: #{tpu_custom_call.1} parent=1 // loop_exit
      _
    %221 = vsyncpa [#allocation3], 1
    %s222 = scalar_lea.sflag [#allocation3], 1
    %223 = vsyncpa %s222, 1

</llo_original>
